<compile_context>
chip_gen: v7x
topology: tpu7x:2x2x1
jax: 0.10.0
libtpu: 0.0.40
codegen_flags: <defaults>
</compile_context>

<pallas_src>
import jax
import jax.numpy as jnp
from jax.experimental import pallas as pl
from jax.experimental.pallas import tpu as pltpu


# ----------------------------------------------------------------------------
# Shared per-step math (runs on values already loaded into vregs).
# ----------------------------------------------------------------------------
def _gru_step(x, h_f32, wcat, ucat, un, bcat):
    """One GRU step.  wcat=(n_in,3n)=[Wr|Wz|2*Wn]^T, ucat=(n_out,2n)=[Ur|Uz]^T,
    un=(n_out,n_out)=Un^T, bcat=(1,3n)=[bwr+bur|bwz+buz|2*bwn+bun]."""
    n = un.shape[0]
    cdt = wcat.dtype  # compute dtype for MXU inputs (f32 or bf16)

    # 2 stacked matmuls instead of 5; f32 accumulation on the MXU.
    wx = jnp.dot(x.astype(cdt), wcat, preferred_element_type=jnp.float32) + bcat
    uh = jnp.dot(h_f32.astype(cdt), ucat, preferred_element_type=jnp.float32)

    r = jax.nn.sigmoid(wx[:, 0:n] + uh[:, 0:n])
    z = jax.nn.sigmoid(wx[:, n:2 * n] + uh[:, n:2 * n])

    # U_n(r*h); its bias (and the doubled W_n bias) are already folded into bcat.
    un_rh = jnp.dot((r * h_f32).astype(cdt), un, preferred_element_type=jnp.float32)

    # Matches the reference's n = tanh(W_n(x) + (W_n(x) + U_n(r*h))); the 2x on
    # W_n / b_wn is folded into wcat/bcat.
    g = jnp.tanh(wx[:, 2 * n:3 * n] + un_rh)

    h_new = z * h_f32 + (1.0 - z) * g
    return h_new, r, z


# ----------------------------------------------------------------------------
# Kernels
# ----------------------------------------------------------------------------
def gru_cell_kernel(x_ref, h_ref, wcat_ref, ucat_ref, un_ref, bcat_ref, out_ref):
    """Single GRU step; output is a lane-dense (B, 3*n_out) slab [h | r | z]."""
    h_new, r, z = _gru_step(
        x_ref[...], h_ref[...].astype(jnp.float32),
        wcat_ref[...], ucat_ref[...], un_ref[...], bcat_ref[...])
    out_ref[...] = jnp.concatenate([h_new, r, z], axis=-1).astype(out_ref.dtype)


def gru_seq_kernel(x_ref, h0_ref, wcat_ref, ucat_ref, un_ref, bcat_ref,
                   out_ref, h_state):
    """Whole time loop inside one pallas_call: grid=(T,).  Weights are resident
    in VMEM (same block index every step); hidden state lives in VMEM scratch."""
    t = pl.program_id(0)

    @pl.when(t == 0)
    def _():
        h_state[...] = h0_ref[...].astype(jnp.float32)

    h = h_state[...]
    h_new, r, z = _gru_step(
        x_ref[0], h, wcat_ref[...], ucat_ref[...], un_ref[...], bcat_ref[...])
    h_state[...] = h_new
    out_ref[0] = jnp.concatenate([h_new, r, z], axis=-1).astype(out_ref.dtype)


# ----------------------------------------------------------------------------
# One-time parameter preparation (out of the hot path).
# ----------------------------------------------------------------------------
def prepare_gru_params(p, compute_dtype=jnp.float32):
    n_out = p["W_r"].shape[0]
    w_cat = jnp.concatenate(
        [p["W_r"].T, p["W_z"].T, 2.0 * p["W_n"].T], axis=1).astype(compute_dtype)
    u_cat = jnp.concatenate(
        [p["U_r"].T, p["U_z"].T], axis=1).astype(compute_dtype)
    un_t = p["U_n"].T.astype(compute_dtype)
    b_cat = jnp.concatenate(
        [p["b_wr"] + p["b_ur"],
         p["b_wz"] + p["b_uz"],
         2.0 * p["b_wn"] + p["b_un"]]).reshape(1, 3 * n_out).astype(jnp.float32)
    return {"W_cat": w_cat, "U_cat": u_cat, "Un_T": un_t, "b_cat": b_cat,
            "n_out": n_out}


# ----------------------------------------------------------------------------
# Wrappers
# ----------------------------------------------------------------------------
def gru_forward(x, h, prep):
    """Single step (mirrors the PyTorch forward).  x: (B, n_in), h: (B, n_out).
    Returns (h_new, (r, z))."""
    B = x.shape[0]
    n_out = prep["n_out"]
    vmem = pl.BlockSpec(memory_space=pltpu.MemorySpace.VMEM)

    out = pl.pallas_call(
        gru_cell_kernel,
        out_shape=jax.ShapeDtypeStruct((B, 3 * n_out), jnp.float32),
        in_specs=[vmem] * 6,
        out_specs=vmem,
    )(x, h, prep["W_cat"], prep["U_cat"], prep["Un_T"], prep["b_cat"])

    h_new = out[:, :n_out]
    r = out[:, n_out:2 * n_out]
    z = out[:, 2 * n_out:]
    return h_new, (r, z)


def gru_sequence(x_seq, h0, prep):
    """Run T GRU steps inside a single pallas_call.  x_seq: (T, B, n_in),
    h0: (B, n_out).  Returns (h_seq, (r_seq, z_seq)), each (T, B, n_out)."""
    T, B, n_in = x_seq.shape
    n_out = prep["n_out"]

    out = pl.pallas_call(
        gru_seq_kernel,
        out_shape=jax.ShapeDtypeStruct((T, B, 3 * n_out), jnp.float32),
        grid=(T,),
        in_specs=[
            pl.BlockSpec((1, B, n_in), lambda t: (t, 0, 0)),        # x_t (streamed)
            pl.BlockSpec((B, n_out), lambda t: (0, 0)),             # h0 (resident)
            pl.BlockSpec((n_in, 3 * n_out), lambda t: (0, 0)),      # W_cat (resident)
            pl.BlockSpec((n_out, 2 * n_out), lambda t: (0, 0)),     # U_cat (resident)
            pl.BlockSpec((n_out, n_out), lambda t: (0, 0)),         # Un_T (resident)
            pl.BlockSpec((1, 3 * n_out), lambda t: (0, 0)),         # bias (resident)
        ],
        out_specs=pl.BlockSpec((1, B, 3 * n_out), lambda t: (t, 0, 0)),
        scratch_shapes=[pltpu.VMEM((B, n_out), jnp.float32)],        # hidden state
        compiler_params=pltpu.CompilerParams(
            dimension_semantics=("arbitrary",)),                     # sequential time
    )(x_seq, h0, prep["W_cat"], prep["U_cat"], prep["Un_T"], prep["b_cat"])

    h_seq = out[:, :, :n_out]
    r_seq = out[:, :, n_out:2 * n_out]
    z_seq = out[:, :, 2 * n_out:]
    return h_seq, (r_seq, z_seq)


# ----------------------------------------------------------------------------
# Init + pure-JAX reference
# ----------------------------------------------------------------------------
def init_gru_params(key, n_in, n_out):
    """Deterministic init mimicking nn.Linear (uniform +-1/sqrt(fan_in))."""
    ks = jax.random.split(key, 12)
    lim_w = 1.0 / jnp.sqrt(jnp.float32(n_in))
    lim_u = 1.0 / jnp.sqrt(jnp.float32(n_out))

    def u(k, shape, lim):
        return jax.random.uniform(k, shape, jnp.float32, -lim, lim)

    return {
        "W_r": u(ks[0], (n_out, n_in), lim_w), "b_wr": u(ks[1], (n_out,), lim_w),
        "W_z": u(ks[2], (n_out, n_in), lim_w), "b_wz": u(ks[3], (n_out,), lim_w),
        "W_n": u(ks[4], (n_out, n_in), lim_w), "b_wn": u(ks[5], (n_out,), lim_w),
        "U_r": u(ks[6], (n_out, n_out), lim_u), "b_ur": u(ks[7], (n_out,), lim_u),
        "U_z": u(ks[8], (n_out, n_out), lim_u), "b_uz": u(ks[9], (n_out,), lim_u),
        "U_n": u(ks[10], (n_out, n_out), lim_u), "b_un": u(ks[11], (n_out,), lim_u),
    }


def gru_reference(x, h, p):
    """Pure-JAX reference mirroring the PyTorch forward exactly."""
    lin = lambda v, W, b: v @ W.T + b
    r = jax.nn.sigmoid(lin(x, p["W_r"], p["b_wr"]) + lin(h, p["U_r"], p["b_ur"]))
    z = jax.nn.sigmoid(lin(x, p["W_z"], p["b_wz"]) + lin(h, p["U_z"], p["b_uz"]))
    wn_x = lin(x, p["W_n"], p["b_wn"])
    n = jnp.tanh(wn_x + (wn_x + lin(r * h, p["U_n"], p["b_un"])))
    h_new = z * h + (1.0 - z) * n
    return h_new, (r, z)


def gru_sequence_reference(x_seq, h0, p):
    hs, rs, zs = [], [], []
    h = h0
    for t in range(x_seq.shape[0]):
        h, (r, z) = gru_reference(x_seq[t], h, p)
        hs.append(h); rs.append(r); zs.append(z)
    return jnp.stack(hs), (jnp.stack(rs), jnp.stack(zs))


# ----------------------------------------------------------------------------
if __name__ == "__main__":
    B, n_in, n_out, T = 2, 16, 32, 8

    key = jax.random.PRNGKey(0)
    k_params, k_x, k_h, k_seq = jax.random.split(key, 4)

    params = init_gru_params(k_params, n_in, n_out)
    x = jax.random.normal(k_x, (B, n_in), jnp.float32)
    h = jax.random.normal(k_h, (B, n_out), jnp.float32)
    x_seq = jax.random.normal(k_seq, (T, B, n_in), jnp.float32)

    # --- single step, f32 (exact semantics of the PyTorch module) ------------
    prep_f32 = prepare_gru_params(params, jnp.float32)
    h_new, (r, z) = gru_forward(x, h, prep_f32)
    jax.block_until_ready((h_new, r, z))

    h_ref, (r_ref, z_ref) = gru_reference(x, h, params)
    assert jnp.allclose(h_new, h_ref, atol=1e-5, rtol=1e-5)
    assert jnp.allclose(r, r_ref, atol=1e-5, rtol=1e-5)
    assert jnp.allclose(z, z_ref, atol=1e-5, rtol=1e-5)

    # --- full sequence inside one pallas_call (weights resident in VMEM) -----
    h_seq, (r_seq, z_seq) = gru_sequence(x_seq, h, prep_f32)
    jax.block_until_ready((h_seq, r_seq, z_seq))

    h_seq_ref, (r_seq_ref, z_seq_ref) = gru_sequence_reference(x_seq, h, params)
    assert jnp.allclose(h_seq, h_seq_ref, atol=1e-4, rtol=1e-4)
    assert jnp.allclose(r_seq, r_seq_ref, atol=1e-4, rtol=1e-4)
    assert jnp.allclose(z_seq, z_seq_ref, atol=1e-4, rtol=1e-4)

    # --- bf16 weights / f32 accumulation path (perf option) ------------------
    prep_bf16 = prepare_gru_params(params, jnp.bfloat16)
    h16, (r16, z16) = gru_forward(x, h, prep_bf16)
    jax.block_until_ready((h16, r16, z16))
    assert jnp.allclose(h16, h_ref, atol=1e-1, rtol=1e-1)

    print("KERNEL_OK")
</pallas_src>

<mosaic_0001>
module attributes {stable_mosaic.version = 11 : i64} {
  func.func @gru_cell_kernel(%arg0: memref<2x16xf32, #tpu.memory_space<vmem>>, %arg1: memref<2x32xf32, #tpu.memory_space<vmem>>, %arg2: memref<16x96xf32, #tpu.memory_space<vmem>>, %arg3: memref<32x64xf32, #tpu.memory_space<vmem>>, %arg4: memref<32x32xf32, #tpu.memory_space<vmem>>, %arg5: memref<1x96xf32, #tpu.memory_space<vmem>>, %arg6: memref<2x96xf32, #tpu.memory_space<vmem>>) attributes {dimension_semantics = [], scalar_prefetch = 0 : i64, scratch_operands = 0 : i64, tpu.core_type = #tpu.core_type<tc>} {
    %c0 = arith.constant 0 : index
    %c0_0 = arith.constant 0 : index
    %0 = vector.load %arg0[%c0, %c0_0] : memref<2x16xf32, #tpu.memory_space<vmem>>, vector<2x16xf32>
    %c0_1 = arith.constant 0 : index
    %c0_2 = arith.constant 0 : index
    %1 = vector.load %arg1[%c0_1, %c0_2] : memref<2x32xf32, #tpu.memory_space<vmem>>, vector<2x32xf32>
    %c0_3 = arith.constant 0 : index
    %c0_4 = arith.constant 0 : index
    %2 = vector.load %arg2[%c0_3, %c0_4] : memref<16x96xf32, #tpu.memory_space<vmem>>, vector<16x96xf32>
    %c0_5 = arith.constant 0 : index
    %c0_6 = arith.constant 0 : index
    %3 = vector.load %arg3[%c0_5, %c0_6] : memref<32x64xf32, #tpu.memory_space<vmem>>, vector<32x64xf32>
    %c0_7 = arith.constant 0 : index
    %c0_8 = arith.constant 0 : index
    %4 = vector.load %arg4[%c0_7, %c0_8] : memref<32x32xf32, #tpu.memory_space<vmem>>, vector<32x32xf32>
    %c0_9 = arith.constant 0 : index
    %c0_10 = arith.constant 0 : index
    %5 = vector.load %arg5[%c0_9, %c0_10] : memref<1x96xf32, #tpu.memory_space<vmem>>, vector<1x96xf32>
    %cst = arith.constant dense<0.000000e+00> : vector<2x96xf32>
    %6 = tpu.matmul %0, %2, %cst {dimension_numbers = #tpu.dot_dimension_numbers<[1], [0], [0], [1], [0, 0, 1, 1], [], []>} : vector<2x16xf32>, vector<16x96xf32>, vector<2x96xf32> -> vector<2x96xf32>
    %7 = vector.broadcast %5 : vector<1x96xf32> to vector<2x96xf32>
    %8 = arith.addf %6, %7 : vector<2x96xf32>
    %cst_11 = arith.constant dense<0.000000e+00> : vector<2x64xf32>
    %9 = tpu.matmul %1, %3, %cst_11 {dimension_numbers = #tpu.dot_dimension_numbers<[1], [0], [0], [1], [0, 0, 1, 1], [], []>} : vector<2x32xf32>, vector<32x64xf32>, vector<2x64xf32> -> vector<2x64xf32>
    %10 = vector.extract_strided_slice %8 {offsets = [0, 0], sizes = [2, 32], strides = [1, 1]} : vector<2x96xf32> to vector<2x32xf32>
    %11 = vector.extract_strided_slice %9 {offsets = [0, 0], sizes = [2, 32], strides = [1, 1]} : vector<2x64xf32> to vector<2x32xf32>
    %12 = arith.addf %10, %11 : vector<2x32xf32>
    %13 = arith.negf %12 : vector<2x32xf32>
    %14 = math.exp %13 : vector<2x32xf32>
    %cst_12 = arith.constant 1.000000e+00 : f32
    %15 = vector.broadcast %cst_12 : f32 to vector<2x32xf32>
    %16 = arith.addf %15, %14 : vector<2x32xf32>
    %17 = arith.divf %15, %16 : vector<2x32xf32>
    %18 = vector.extract_strided_slice %8 {offsets = [0, 32], sizes = [2, 32], strides = [1, 1]} : vector<2x96xf32> to vector<2x32xf32>
    %19 = vector.extract_strided_slice %9 {offsets = [0, 32], sizes = [2, 32], strides = [1, 1]} : vector<2x64xf32> to vector<2x32xf32>
    %20 = arith.addf %18, %19 : vector<2x32xf32>
    %21 = arith.negf %20 : vector<2x32xf32>
    %22 = math.exp %21 : vector<2x32xf32>
    %cst_13 = arith.constant 1.000000e+00 : f32
    %23 = vector.broadcast %cst_13 : f32 to vector<2x32xf32>
    %24 = arith.addf %23, %22 : vector<2x32xf32>
    %25 = arith.divf %23, %24 : vector<2x32xf32>
    %26 = arith.mulf %17, %1 : vector<2x32xf32>
    %cst_14 = arith.constant dense<0.000000e+00> : vector<2x32xf32>
    %27 = tpu.matmul %26, %4, %cst_14 {dimension_numbers = #tpu.dot_dimension_numbers<[1], [0], [0], [1], [0, 0, 1, 1], [], []>} : vector<2x32xf32>, vector<32x32xf32>, vector<2x32xf32> -> vector<2x32xf32>
    %28 = vector.extract_strided_slice %8 {offsets = [0, 64], sizes = [2, 32], strides = [1, 1]} : vector<2x96xf32> to vector<2x32xf32>
    %29 = arith.addf %28, %27 : vector<2x32xf32>
    %30 = math.tanh %29 : vector<2x32xf32>
    %31 = arith.mulf %25, %1 : vector<2x32xf32>
    %cst_15 = arith.constant 1.000000e+00 : f32
    %32 = vector.broadcast %cst_15 : f32 to vector<2x32xf32>
    %33 = arith.subf %32, %25 : vector<2x32xf32>
    %34 = arith.mulf %33, %30 : vector<2x32xf32>
    %35 = arith.addf %31, %34 : vector<2x32xf32>
    %36 = tpu.concatenate %35, %17, %25 in 1 : vector<2x32xf32>, vector<2x32xf32>, vector<2x32xf32> -> vector<2x96xf32>
    %c0_16 = arith.constant 0 : index
    %c0_17 = arith.constant 0 : index
    %37 = vector.load %arg6[%c0_16, %c0_17] : memref<2x96xf32, #tpu.memory_space<vmem>>, vector<2x96xf32>
    tpu.vector_store %arg6[%c0_16, %c0_17], %36 {strides = array<i32>} : memref<2x96xf32, #tpu.memory_space<vmem>>, vector<2x96xf32>,
    return
  }
}

</mosaic_0001>

<llo_original>
// kernel: tpu_custom_call.1
$region0: #{tpu_custom_call.1}
  #allocation0 [shape = 'u32[]', space=smem, size = 0x4, offset = 0x4, fixed_abs, tag = 'smem constant byte address 0x4 - core index']
  #allocation1 [shape = 'u32[144,128]{1,0:T(1,128)}', space=vmem, size = 0x12000, scoped, tag = 'internal scratch']
  %s0 = inlined_call_operand.hbm [shape: f32[2,16], index: 0, kind: input, shape index: {}]
  %s1 = inlined_call_operand.vmem [shape: f32[2,32], index: 1, kind: input, shape index: {}]
  %s2 = inlined_call_operand.hbm [shape: f32[16,96], index: 2, kind: input, shape index: {}]
  %s3 = inlined_call_operand.hbm [shape: f32[32,64], index: 3, kind: input, shape index: {}]
  %s4 = inlined_call_operand.hbm [shape: f32[32,32], index: 4, kind: input, shape index: {}]
  %s5 = inlined_call_operand.vmem [shape: f32[1,96], index: 5, kind: input, shape index: {}]
  %s6 = inlined_call_operand.hbm [shape: f32[2,96], index: 6, kind: output, shape index: {}]
  %s7 = sld [smem:[#allocation0]]
  $region50: #{tpu_custom_call.1} parent=0
    _
  %s9 = ssub.s32 1, %s7
  %s10 = scalar_select 0, %s9, %s7
  $region1: #{tpu_custom_call.1} parent=0
    #allocation2 [shape = 'u8[1024]{0}', space=vmem, size = 0x400, scoped, tag = 'input window, operand 0, single buffered']
    #allocation3 [shape = 's32[1]{0}', space=sflag, size = 0x4, scoped, tag = 'scoped memory for tpu_custom_call.1']
    #allocation4 [shape = 's32[1]{0}', space=sflag, size = 0x4, scoped, tag = 'scoped memory for tpu_custom_call.1']
    #allocation5 [shape = 'u8[8192]{0}', space=vmem, size = 0x2000, scoped, tag = 'input window, operand 2, single buffered']
    #allocation6 [shape = 's32[1]{0}', space=sflag, size = 0x4, scoped, tag = 'scoped memory for tpu_custom_call.1']
    #allocation7 [shape = 'u8[16384]{0}', space=vmem, size = 0x4000, scoped, tag = 'input window, operand 3, single buffered']
    #allocation8 [shape = 'u8[16384]{0}', space=vmem, size = 0x4000, scoped, tag = 'input window, operand 4, single buffered']
    #allocation9 [shape = 's32[1]{0}', space=sflag, size = 0x4, scoped, tag = 'scoped memory for tpu_custom_call.1']
    #allocation10 [shape = 'u8[1024]{0}', space=vmem, size = 0x400, scoped, tag = 'output window, operand 0, single buffered']
    %11 = vsyncpa [#allocation3], 0
    %12 = vsyncpa [#allocation6], 0
    %13 = vsyncpa [#allocation9], 0
    %14 = vsyncpa [#allocation4], 0
    // Predicated region
    $region2: #{tpu_custom_call.1} parent=1 // pred_check
      _
    $region3: #{tpu_custom_call.1} parent=1 // pred_check_branch
      %16 = sbr.rel (0) target = $region5
    $region4: #{tpu_custom_call.1} parent=1 // pred_region
      %s18 = ssub.s32 32, 32
      %19 = vsyncadd [#allocation3], %s18
      %s21 = sshll.u32 [#allocation2], 4
      %s22 = int_to_ptr.vmem [resolvable:$true] %s21
      %24 = dma.hbm_to_vmem [thread:$0]  %s0, 32, %s22, [#allocation3]
    $region5: #{tpu_custom_call.1} parent=1 // pred_fallthru
      _
    // Predicated region
    $region6: #{tpu_custom_call.1} parent=1 // pred_check
      _
    $region7: #{tpu_custom_call.1} parent=1 // pred_check_branch
      %26 = sbr.rel (0) target = $region9
    $region8: #{tpu_custom_call.1} parent=1 // pred_region
      _
    $region9: #{tpu_custom_call.1} parent=1 // pred_fallthru
      _
    // Predicated region
    $region10: #{tpu_custom_call.1} parent=1 // pred_check
      _
    $region11: #{tpu_custom_call.1} parent=1 // pred_check_branch
      %28 = sbr.rel (0) target = $region13
    $region12: #{tpu_custom_call.1} parent=1 // pred_region
      %s30 = ssub.s32 256, 256
      %31 = vsyncadd [#allocation6], %s30
      %s32 = sshll.u32 [#allocation5], 4
      %s33 = int_to_ptr.vmem [resolvable:$true] %s32
      %38 = dma.hbm_to_vmem [thread:$0]  %s2, 256, %s33, [#allocation6], 128, 128, 8
    $region13: #{tpu_custom_call.1} parent=1 // pred_fallthru
      _
    // Predicated region
    $region14: #{tpu_custom_call.1} parent=1 // pred_check
      _
    $region15: #{tpu_custom_call.1} parent=1 // pred_check_branch
      %40 = sbr.rel (0) target = $region17
    $region16: #{tpu_custom_call.1} parent=1 // pred_region
      %s42 = ssub.s32 512, 512
      %43 = vsyncadd [#allocation6], %s42
      %s44 = sshll.u32 [#allocation7], 4
      %s45 = int_to_ptr.vmem [resolvable:$true] %s44
      %50 = dma.hbm_to_vmem [thread:$0]  %s3, 512, %s45, [#allocation6], 128, 128, 8
    $region17: #{tpu_custom_call.1} parent=1 // pred_fallthru
      _
    // Predicated region
    $region18: #{tpu_custom_call.1} parent=1 // pred_check
      _
    $region19: #{tpu_custom_call.1} parent=1 // pred_check_branch
      %52 = sbr.rel (0) target = $region21
    $region20: #{tpu_custom_call.1} parent=1 // pred_region
      %s54 = ssub.s32 512, 512
      %55 = vsyncadd [#allocation9], %s54
      %s56 = sshll.u32 [#allocation8], 4
      %s57 = int_to_ptr.vmem [resolvable:$true] %s56
      %62 = dma.hbm_to_vmem [thread:$0]  %s4, 512, %s57, [#allocation9], 128, 128, 8
    $region21: #{tpu_custom_call.1} parent=1 // pred_fallthru
      _
    // Predicated region
    $region22: #{tpu_custom_call.1} parent=1 // pred_check
      _
    $region23: #{tpu_custom_call.1} parent=1 // pred_check_branch
      %64 = sbr.rel (0) target = $region25
    $region24: #{tpu_custom_call.1} parent=1 // pred_region
      _
    $region25: #{tpu_custom_call.1} parent=1 // pred_fallthru
      _
    // Predicated region
    $region26: #{tpu_custom_call.1} parent=1 // pred_check
      _
    $region27: #{tpu_custom_call.1} parent=1 // pred_check_branch
      %66 = sbr.rel (0) target = $region29
    $region28: #{tpu_custom_call.1} parent=1 // pred_region
      %67 = dma.done [#allocation3], 32
    $region29: #{tpu_custom_call.1} parent=1 // pred_fallthru
      _
    // Predicated region
    $region30: #{tpu_custom_call.1} parent=1 // pred_check
      _
    $region31: #{tpu_custom_call.1} parent=1 // pred_check_branch
      %69 = sbr.rel (0) target = $region33
    $region32: #{tpu_custom_call.1} parent=1 // pred_region
      %70 = dma.done [#allocation6], 256
    $region33: #{tpu_custom_call.1} parent=1 // pred_fallthru
      _
    // Predicated region
    $region34: #{tpu_custom_call.1} parent=1 // pred_check
      _
    $region35: #{tpu_custom_call.1} parent=1 // pred_check_branch
      %72 = sbr.rel (0) target = $region37
    $region36: #{tpu_custom_call.1} parent=1 // pred_region
      %73 = dma.done [#allocation6], 512
    $region37: #{tpu_custom_call.1} parent=1 // pred_fallthru
      _
    // Predicated region
    $region38: #{tpu_custom_call.1} parent=1 // pred_check
      _
    $region39: #{tpu_custom_call.1} parent=1 // pred_check_branch
      %75 = sbr.rel (0) target = $region41
    $region40: #{tpu_custom_call.1} parent=1 // pred_region
      %76 = dma.done [#allocation9], 512
    $region41: #{tpu_custom_call.1} parent=1 // pred_fallthru
      _
    %v77 = vld [vmem:[#allocation2] sm:$0x3]
    %v78 = vld [vmem:[%s1] sm:$0x3]
    %v79 = vld [vmem:[#allocation5] sm:$0xff]
    %v80 = vld [vmem:[#allocation5 + $0x8] sm:$0xff]
    %v81 = vld [vmem:[#allocation7] sm:$0xff]
    %v82 = vld [vmem:[#allocation7 + $0x8] sm:$0xff]
    %v83 = vld [vmem:[#allocation7 + $0x10] sm:$0xff]
    %v84 = vld [vmem:[#allocation7 + $0x18] sm:$0xff]
    %v85 = vld [vmem:[#allocation8] sm:$0xff]
    %v86 = vld [vmem:[#allocation8 + $0x8] sm:$0xff]
    %v87 = vld [vmem:[#allocation8 + $0x10] sm:$0xff]
    %v88 = vld [vmem:[#allocation8 + $0x18] sm:$0xff]
    %v89 = vld [vmem:[%s5] sm:$0x1]
    %v91 = vlaneseq
    %v92 = vshrl.u32 %v91, 7
    %v93 = vsub.s32 0, %v92
    %v94 = vrot.slane %v89, %v93
    %vm96 = vcmask 130048
    %v98 = vsel %vm96, %v77, 0
    %100 = vmatprep.subr.mxu0 0.0
    %101 = vmatpush1.msra.mxu0 %v79
    %102 = vmatprep.subr.mxu0 0.0
    %103 = vmatpush1.msra.mxu0 %v80
    %104 = vmatprep.subr.mxu0 0.0
    %105 = vmatpush1.msra.mxu0 0.0
    %106 = vmatprep.subr.mxu0 0.0
    %107 = vmatpush1.msra.mxu0 0.0
    %108 = vmatprep.subr.mxu0 0.0
    %109 = vmatpush1.msra.mxu0 0.0
    %110 = vmatprep.subr.mxu0 0.0
    %111 = vmatpush1.msra.mxu0 0.0
    %112 = vmatprep.subr.mxu0 0.0
    %113 = vmatpush1.msra.mxu0 0.0
    %114 = vmatprep.subr.mxu0 0.0
    %115 = vmatpush1.msra.mxu0 0.0
    %116 = vmatprep.subr.mxu0 0.0
    %117 = vmatpush1.msra.mxu0 0.0
    %118 = vmatprep.subr.mxu0 0.0
    %119 = vmatpush1.msra.mxu0 0.0
    %120 = vmatprep.subr.mxu0 0.0
    %121 = vmatpush1.msra.mxu0 0.0
    %122 = vmatprep.subr.mxu0 0.0
    %123 = vmatpush1.msra.mxu0 0.0
    %124 = vmatprep.subr.mxu0 0.0
    %125 = vmatpush1.msra.mxu0 0.0
    %126 = vmatprep.subr.mxu0 0.0
    %127 = vmatpush1.msra.mxu0 0.0
    %128 = vmatprep.subr.mxu0 0.0
    %129 = vmatpush1.msra.mxu0 0.0
    %130 = vmatprep.subr.mxu0 0.0
    %131 = vmatpush1.msra.mxu0 0.0
    %132 = vmatprep.subr.mxu0 0.0
    %133 = vmatpush1.msra.mxu0 0.0
    %134 = vmatprep.subr.mxu0 0.0
    %135 = vmatpush1.msra.mxu0 0.0
    %136 = vmatprep.subr.mxu0 0.0
    %137 = vmatpush1.msra.mxu0 0.0
    %138 = vmatprep.subr.mxu0 0.0
    %139 = vmatpush1.msra.mxu0 0.0
    %140 = vmatprep.subr.mxu0 0.0
    %141 = vmatpush1.msra.mxu0 0.0
    %142 = vmatprep.subr.mxu0 0.0
    %143 = vmatpush1.msra.mxu0 0.0
    %144 = vmatprep.subr.mxu0 0.0
    %145 = vmatpush1.msra.mxu0 0.0
    %146 = vmatprep.subr.mxu0 0.0
    %147 = vmatpush1.msra.mxu0 0.0
    %148 = vmatprep.subr.mxu0 0.0
    %149 = vmatpush1.msra.mxu0 0.0
    %150 = vmatprep.subr.mxu0 0.0
    %151 = vmatpush1.msra.mxu0 0.0
    %152 = vmatprep.subr.mxu0 0.0
    %153 = vmatpush1.msra.mxu0 0.0
    %154 = vmatprep.subr.mxu0 0.0
    %155 = vmatpush1.msra.mxu0 0.0
    %156 = vmatprep.subr.mxu0 0.0
    %157 = vmatpush1.msra.mxu0 0.0
    %158 = vmatprep.subr.mxu0 0.0
    %159 = vmatpush1.msra.mxu0 0.0
    %160 = vmatprep.subr.mxu0 0.0
    %161 = vmatpush1.msra.mxu0 0.0
    %162 = vmatprep.subr.mxu0 0.0
    %163 = vmatpush1.msra.mxu0 0.0
    %164 = vmatprep.mubr.f32.mxu0 0.0
    %165 = vmatmul.mubr.f32.gmra.mrb[0].mxu0 %v98
    %v166 = vpop.f32.mrb[0].mxu0
    %v167 = vadd.f32 %v94, %v166
    %v168 = vpop.f32.mrb[0].mxu0
    %169 = vdwg.mxu0
    %vm170 = vcmask 261120
    %v172 = vsel %vm170, %v78, 0
    %174 = vmatprep.subr.mxu0 0.0
    %175 = vmatpush1.msra.mxu0 %v81
    %176 = vmatprep.subr.mxu0 0.0
    %177 = vmatpush1.msra.mxu0 %v82
    %178 = vmatprep.subr.mxu0 0.0
    %179 = vmatpush1.msra.mxu0 %v83
    %180 = vmatprep.subr.mxu0 0.0
    %181 = vmatpush1.msra.mxu0 %v84
    %182 = vmatprep.subr.mxu0 0.0
    %183 = vmatpush1.msra.mxu0 0.0
    %184 = vmatprep.subr.mxu0 0.0
    %185 = vmatpush1.msra.mxu0 0.0
    %186 = vmatprep.subr.mxu0 0.0
    %187 = vmatpush1.msra.mxu0 0.0
    %188 = vmatprep.subr.mxu0 0.0
    %189 = vmatpush1.msra.mxu0 0.0
    %190 = vmatprep.subr.mxu0 0.0
    %191 = vmatpush1.msra.mxu0 0.0
    %192 = vmatprep.subr.mxu0 0.0
    %193 = vmatpush1.msra.mxu0 0.0
    %194 = vmatprep.subr.mxu0 0.0
    %195 = vmatpush1.msra.mxu0 0.0
    %196 = vmatprep.subr.mxu0 0.0
    %197 = vmatpush1.msra.mxu0 0.0
    %198 = vmatprep.subr.mxu0 0.0
    %199 = vmatpush1.msra.mxu0 0.0
    %200 = vmatprep.subr.mxu0 0.0
    %201 = vmatpush1.msra.mxu0 0.0
    %202 = vmatprep.subr.mxu0 0.0
    %203 = vmatpush1.msra.mxu0 0.0
    %204 = vmatprep.subr.mxu0 0.0
    %205 = vmatpush1.msra.mxu0 0.0
    %206 = vmatprep.subr.mxu0 0.0
    %207 = vmatpush1.msra.mxu0 0.0
    %208 = vmatprep.subr.mxu0 0.0
    %209 = vmatpush1.msra.mxu0 0.0
    %210 = vmatprep.subr.mxu0 0.0
    %211 = vmatpush1.msra.mxu0 0.0
    %212 = vmatprep.subr.mxu0 0.0
    %213 = vmatpush1.msra.mxu0 0.0
    %214 = vmatprep.subr.mxu0 0.0
    %215 = vmatpush1.msra.mxu0 0.0
    %216 = vmatprep.subr.mxu0 0.0
    %217 = vmatpush1.msra.mxu0 0.0
    %218 = vmatprep.subr.mxu0 0.0
    %219 = vmatpush1.msra.mxu0 0.0
    %220 = vmatprep.subr.mxu0 0.0
    %221 = vmatpush1.msra.mxu0 0.0
    %222 = vmatprep.subr.mxu0 0.0
    %223 = vmatpush1.msra.mxu0 0.0
    %224 = vmatprep.subr.mxu0 0.0
    %225 = vmatpush1.msra.mxu0 0.0
    %226 = vmatprep.subr.mxu0 0.0
    %227 = vmatpush1.msra.mxu0 0.0
    %228 = vmatprep.subr.mxu0 0.0
    %229 = vmatpush1.msra.mxu0 0.0
    %230 = vmatprep.subr.mxu0 0.0
    %231 = vmatpush1.msra.mxu0 0.0
    %232 = vmatprep.subr.mxu0 0.0
    %233 = vmatpush1.msra.mxu0 0.0
    %234 = vmatprep.subr.mxu0 0.0
    %235 = vmatpush1.msra.mxu0 0.0
    %236 = vmatprep.subr.mxu0 0.0
    %237 = vmatpush1.msra.mxu0 0.0
    %238 = vmatprep.mubr.f32.mxu0 0.0
    %239 = vmatmul.mubr.f32.gmra.mrb[0].mxu0 %v172
    %v240 = vpop.f32.mrb[0].mxu0
    %v241 = vadd.f32 0.0, %v240
    %v242 = vpop.f32.mrb[0].mxu0
    %243 = vdwg.mxu0
    %v244 = vadd.f32 %v167, %v241
    %v245 = vxor.u32 %v244, 2147483648
    %v246 = vmul.f32 %v245, 1.442695
    %v247 = vpow.pop %v246
    %v248 = vadd.f32 %v247, 1.0
    %v249 = vrcp.pop %v248
    %v250 = vmul.f32 1.0, %v249
    %v251 = vmul.f32 %v250, %v78
    %v253 = vsel %vm170, %v251, 0
    %255 = vmatprep.subr.mxu0 0.0
    %256 = vmatpush1.msra.mxu0 %v85
    %257 = vmatprep.subr.mxu0 0.0
    %258 = vmatpush1.msra.mxu0 %v86
    %259 = vmatprep.subr.mxu0 0.0
    %260 = vmatpush1.msra.mxu0 %v87
    %261 = vmatprep.subr.mxu0 0.0
    %262 = vmatpush1.msra.mxu0 %v88
    %263 = vmatprep.subr.mxu0 0.0
    %264 = vmatpush1.msra.mxu0 0.0
    %265 = vmatprep.subr.mxu0 0.0
    %266 = vmatpush1.msra.mxu0 0.0
    %267 = vmatprep.subr.mxu0 0.0
    %268 = vmatpush1.msra.mxu0 0.0
    %269 = vmatprep.subr.mxu0 0.0
    %270 = vmatpush1.msra.mxu0 0.0
    %271 = vmatprep.subr.mxu0 0.0
    %272 = vmatpush1.msra.mxu0 0.0
    %273 = vmatprep.subr.mxu0 0.0
    %274 = vmatpush1.msra.mxu0 0.0
    %275 = vmatprep.subr.mxu0 0.0
    %276 = vmatpush1.msra.mxu0 0.0
    %277 = vmatprep.subr.mxu0 0.0
    %278 = vmatpush1.msra.mxu0 0.0
    %279 = vmatprep.subr.mxu0 0.0
    %280 = vmatpush1.msra.mxu0 0.0
    %281 = vmatprep.subr.mxu0 0.0
    %282 = vmatpush1.msra.mxu0 0.0
    %283 = vmatprep.subr.mxu0 0.0
    %284 = vmatpush1.msra.mxu0 0.0
    %285 = vmatprep.subr.mxu0 0.0
    %286 = vmatpush1.msra.mxu0 0.0
    %287 = vmatprep.subr.mxu0 0.0
    %288 = vmatpush1.msra.mxu0 0.0
    %289 = vmatprep.subr.mxu0 0.0
    %290 = vmatpush1.msra.mxu0 0.0
    %291 = vmatprep.subr.mxu0 0.0
    %292 = vmatpush1.msra.mxu0 0.0
    %293 = vmatprep.subr.mxu0 0.0
    %294 = vmatpush1.msra.mxu0 0.0
    %295 = vmatprep.subr.mxu0 0.0
    %296 = vmatpush1.msra.mxu0 0.0
    %297 = vmatprep.subr.mxu0 0.0
    %298 = vmatpush1.msra.mxu0 0.0
    %299 = vmatprep.subr.mxu0 0.0
    %300 = vmatpush1.msra.mxu0 0.0
    %301 = vmatprep.subr.mxu0 0.0
    %302 = vmatpush1.msra.mxu0 0.0
    %303 = vmatprep.subr.mxu0 0.0
    %304 = vmatpush1.msra.mxu0 0.0
    %305 = vmatprep.subr.mxu0 0.0
    %306 = vmatpush1.msra.mxu0 0.0
    %307 = vmatprep.subr.mxu0 0.0
    %308 = vmatpush1.msra.mxu0 0.0
    %309 = vmatprep.subr.mxu0 0.0
    %310 = vmatpush1.msra.mxu0 0.0
    %311 = vmatprep.subr.mxu0 0.0
    %312 = vmatpush1.msra.mxu0 0.0
    %313 = vmatprep.subr.mxu0 0.0
    %314 = vmatpush1.msra.mxu0 0.0
    %315 = vmatprep.subr.mxu0 0.0
    %316 = vmatpush1.msra.mxu0 0.0
    %317 = vmatprep.subr.mxu0 0.0
    %318 = vmatpush1.msra.mxu0 0.0
    %319 = vmatprep.mubr.f32.mxu0 0.0
    %320 = vmatmul.mubr.f32.gmra.mrb[0].mxu0 %v253
    %v321 = vpop.f32.mrb[0].mxu0
    %v322 = vadd.f32 0.0, %v321
    %v323 = vpop.f32.mrb[0].mxu0
    %324 = vdwg.mxu0
    %326 = vrot.lane.b32.xlu0 %v322, 64
    %v327 = vpop.permute.xlu0 %326
    %v329 = vadd.f32 %v167, %v327
    %v330 = vtanh.pop %v329
    %331 = vrot.lane.b32.xlu0 %v78, 32
    %v332 = vpop.permute.xlu0 %331
    %v334 = vmul.f32 %v250, %v332
    %v335 = vsub.f32 1.0, %v250
    %337 = vrot.lane.b32.xlu0 %v330, 96
    %v338 = vpop.permute.xlu0 %337
    %v340 = vmul.f32 %v335, %v338
    %v341 = vadd.f32 %v334, %v340
    %343 = vrot.lane.b32.xlu0 %v341, 96
    %v344 = vpop.permute.xlu0 %343
    %347 = vrot.lane.b32.xlu0 %v250, 32
    %v348 = vpop.permute.xlu0 %347
    %v350 = vsel %vm170, %v344, %v348
    %vm351 = vcmask 523264
    %v352 = vsel %vm351, %v350, %v348
    %vm353 = vcmask 779264
    %354 = vst.msk [vmem:[#allocation10] sm:$0x3] %vm353, %v352
    // Predicated region
    $region42: #{tpu_custom_call.1} parent=1 // pred_check
      _
    $region43: #{tpu_custom_call.1} parent=1 // pred_check_branch
      %356 = sbr.rel (0) target = $region45
    $region44: #{tpu_custom_call.1} parent=1 // pred_region
      %s358 = ssub.s32 32, 32
      %359 = vsyncadd [#allocation4], %s358
      %s361 = sshll.u32 [#allocation10], 4
      %s362 = int_to_ptr.vmem [resolvable:$true] %s361
      %364 = dma.vmem_to_hbm [thread:$0]  %s362, 32, %s6, [#allocation4]
    $region45: #{tpu_custom_call.1} parent=1 // pred_fallthru
      _
    // Predicated region
    $region46: #{tpu_custom_call.1} parent=1 // pred_check
      _
    $region47: #{tpu_custom_call.1} parent=1 // pred_check_branch
      %366 = sbr.rel (0) target = $region49
    $region48: #{tpu_custom_call.1} parent=1 // pred_region
      %367 = dma.done [#allocation4], 32
    $region49: #{tpu_custom_call.1} parent=1 // pred_fallthru
      _
    %368 = vsyncpa [#allocation3], 1
    %369 = vsyncpa [#allocation6], 1
    %370 = vsyncpa [#allocation9], 1
    %371 = vsyncpa [#allocation4], 1

</llo_original>
